<compile_context>
chip_gen: v5e
topology: v5e:2x2
jax: 0.10.0
libtpu: 0.0.40
codegen_flags: <defaults>
</compile_context>

<pallas_src>
import functools
import math

import numpy as np
import jax
import jax.numpy as jnp
from jax.experimental import pallas as pl
from jax.experimental.pallas import tpu as pltpu


_VMEM_LIMIT_BYTES = 32 * 1024 * 1024      # safe under v7x's 64 MiB physical
_P_RESIDENT_MAX_BYTES = 8 * 1024 * 1024   # keep resident-P well inside VMEM


def _round_up(v, m):
    return ((v + m - 1) // m) * m


# ---------------------------------------------------------------------------
# Kernel 1: fused projections.
#   y = x @ [W_l | W_r];  P = y[:, :C];  S = y[:, C:]   (both bf16, no bias)
# ---------------------------------------------------------------------------
def _sage_project_kernel(x_ref, w_ref, p_ref, s_ref):
    y = jnp.dot(x_ref[...], w_ref[...], preferred_element_type=jnp.float32)
    c = p_ref.shape[-1]
    p_ref[...] = y[:, :c].astype(p_ref.dtype)
    s_ref[...] = y[:, c:].astype(s_ref.dtype)


# ---------------------------------------------------------------------------
# Kernel 2: block-sparse mean aggregation + epilogue:
#   out = relu?( inv_deg * (B @ P) + S + bias )
# Grid: (row tiles, max-nonzero-column-blocks).  A/P fetches are driven by the
# scalar-prefetched nonzero block-id list, so zero blocks cost no HBM traffic.
# ---------------------------------------------------------------------------
def _sage_aggregate_kernel(ids_ref, cnt_ref, a_ref, p_ref, s_ref, inv_ref,
                           b_ref, o_ref, acc_ref, *, apply_relu, p_resident,
                           tk, max_cnt):
    i = pl.program_id(0)
    k = pl.program_id(1)
    nk = pl.num_programs(1)

    @pl.when(k == 0)
    def _init():
        acc_ref[...] = jnp.zeros_like(acc_ref)

    # Only the first cnt_ref[i] steps carry real (nonzero) adjacency blocks.
    @pl.when(k < cnt_ref[i])
    def _accumulate():
        a_bf = a_ref[...].astype(jnp.bfloat16)   # int8 0/1 counts -> bf16 (exact)
        if p_resident:
            kb = ids_ref[i * max_cnt + k]
            row0 = pl.multiple_of(kb * tk, tk)
            p_blk = p_ref[pl.ds(row0, tk), :]
        else:
            p_blk = p_ref[...]
        acc_ref[...] += jnp.dot(a_bf, p_blk, preferred_element_type=jnp.float32)

    @pl.when(k == nk - 1)
    def _finalize():
        out = (acc_ref[...] * inv_ref[...]
               + s_ref[...].astype(jnp.float32) + b_ref[...])   # f32 epilogue
        if apply_relu:
            out = jnp.maximum(out, 0.0)
        o_ref[...] = out.astype(o_ref.dtype)


def _sage_layer(a_i8, ids_flat, counts, inv_deg, x_pad, w_cat, b_row, *,
                apply_relu, out_dtype, tm, tk, max_cnt, nnz_blocks):
    n_row_pad, cin_pad = x_pad.shape
    cout_pad = b_row.shape[-1]
    ni = n_row_pad // tm

    # ---- fused projection pass (one MXU pass for both linear maps) ----
    p, s = pl.pallas_call(
        _sage_project_kernel,
        out_shape=(
            jax.ShapeDtypeStruct((n_row_pad, cout_pad), jnp.bfloat16),  # P
            jax.ShapeDtypeStruct((n_row_pad, cout_pad), jnp.bfloat16),  # S
        ),
        grid_spec=pltpu.PrefetchScalarGridSpec(
            num_scalar_prefetch=0,
            grid=(ni,),
            in_specs=[
                pl.BlockSpec((tm, cin_pad), lambda i: (i, 0)),
                pl.BlockSpec((cin_pad, 2 * cout_pad), lambda i: (0, 0)),
            ],
            out_specs=[
                pl.BlockSpec((tm, cout_pad), lambda i: (i, 0)),
                pl.BlockSpec((tm, cout_pad), lambda i: (i, 0)),
            ],
        ),
        compiler_params=pltpu.CompilerParams(
            dimension_semantics=("parallel",),
            vmem_limit_bytes=_VMEM_LIMIT_BYTES),
    )(x_pad, w_cat)

    # ---- block-sparse aggregation pass ----
    p_resident = (n_row_pad * cout_pad * 2) <= _P_RESIDENT_MAX_BYTES
    if p_resident:
        # Whole P resident in VMEM; constant index map -> fetched once.
        p_spec = pl.BlockSpec((n_row_pad, cout_pad),
                              lambda i, k, ids, cnt: (0, 0))
        p_bytes = n_row_pad * cout_pad * 2
    else:
        # Stream only the P blocks matching nonzero adjacency blocks.
        p_spec = pl.BlockSpec(
            (tk, cout_pad),
            lambda i, k, ids, cnt: (ids[i * max_cnt + k], 0))
        p_bytes = nnz_blocks * tk * cout_pad * 2

    flops = 2 * nnz_blocks * tm * tk * cout_pad + 4 * n_row_pad * cout_pad
    bytes_accessed = (
        nnz_blocks * tm * tk                                   # A (int8)
        + p_bytes                                              # P (bf16)
        + n_row_pad * cout_pad * 2                             # S (bf16)
        + n_row_pad * 4 + cout_pad * 4                         # inv_deg, bias
        + n_row_pad * cout_pad * jnp.dtype(out_dtype).itemsize)

    out = pl.pallas_call(
        functools.partial(_sage_aggregate_kernel, apply_relu=apply_relu,
                          p_resident=p_resident, tk=tk, max_cnt=max_cnt),
        out_shape=jax.ShapeDtypeStruct((n_row_pad, cout_pad), out_dtype),
        grid_spec=pltpu.PrefetchScalarGridSpec(
            num_scalar_prefetch=2,        # nonzero-block ids + per-row counts
            grid=(ni, max_cnt),
            in_specs=[
                pl.BlockSpec((tm, tk),
                             lambda i, k, ids, cnt: (i, ids[i * max_cnt + k])),
                p_spec,
                pl.BlockSpec((tm, cout_pad), lambda i, k, ids, cnt: (i, 0)),
                pl.BlockSpec((tm, 1), lambda i, k, ids, cnt: (i, 0)),
                pl.BlockSpec((1, cout_pad), lambda i, k, ids, cnt: (0, 0)),
            ],
            out_specs=pl.BlockSpec((tm, cout_pad),
                                   lambda i, k, ids, cnt: (i, 0)),
            scratch_shapes=[pltpu.VMEM((tm, cout_pad), jnp.float32)],
        ),
        compiler_params=pltpu.CompilerParams(
            dimension_semantics=("parallel", "arbitrary"),
            vmem_limit_bytes=_VMEM_LIMIT_BYTES),
        cost_estimate=pl.CostEstimate(
            flops=int(flops), transcendentals=0,
            bytes_accessed=int(bytes_accessed)),
    )(ids_flat, counts, a_i8, p, s, inv_deg, b_row)
    return out


def sage_encoder(x, edge_index, params, *, tm=512, tk=256):
    """x: [N, Fin] f32; edge_index: [2, E] int32 (row 0 = src, row 1 = dst).

    Graph preprocessing (adjacency, degrees, nonzero-block structure) is done
    host-side at trace time; the graph structure must be concrete.
    """
    assert tm % tk == 0 and tk % 128 == 0, "require tk | tm and lane-aligned tk"
    n, fin = x.shape
    w1l, w1r, b1, w2l, w2r, b2 = params
    hidden = w1l.shape[1]
    out_ch = w2l.shape[1]

    # ---- per-axis padding (no lcm blow-up): rows -> tm, cols -> tk ----
    n_row_pad = _round_up(n, tm)          # rows of A / S / inv_deg / output
    n_col_pad = _round_up(n, tk)          # cols of A (<= n_row_pad since tk|tm)
    ni = n_row_pad // tm
    nkb = n_col_pad // tk
    cin_p = _round_up(fin, 128)
    hid_p = _round_up(hidden, 128)
    out_p = _round_up(out_ch, 128)

    # ---- host-side adjacency + block-sparsity structure ----
    src = np.asarray(edge_index[0])
    dst = np.asarray(edge_index[1])
    b_mat = np.zeros((n_row_pad, n_col_pad), np.int8)
    np.add.at(b_mat, (dst, src), 1)       # edge multiplicities (assumed < 128)
    deg = b_mat.astype(np.float32).sum(axis=1)
    inv_deg = (1.0 / np.maximum(deg, 1.0)).astype(np.float32).reshape(-1, 1)

    blk_nnz = b_mat.reshape(ni, tm, nkb, tk).astype(bool).any(axis=(1, 3))
    counts = blk_nnz.sum(axis=1).astype(np.int32)           # (ni,)
    max_cnt = max(int(counts.max()) if counts.size else 0, 1)
    ids = np.zeros((ni, max_cnt), np.int32)
    for i in range(ni):
        nz = np.flatnonzero(blk_nnz[i])
        if nz.size:
            ids[i, :nz.size] = nz
            ids[i, nz.size:] = nz[-1]     # repeat last id -> no re-DMA on tail
    nnz_blocks = int(blk_nnz.sum())

    a_i8 = jnp.asarray(b_mat)                      # 1 byte/elem HBM stream
    inv_deg_dev = jnp.asarray(inv_deg)             # (n_row_pad, 1) f32
    ids_flat = jnp.asarray(ids.reshape(-1))        # SMEM scalar prefetch
    counts_dev = jnp.asarray(counts)

    x_pad = jnp.pad(x, ((0, n_row_pad - n), (0, cin_p - fin))).astype(jnp.bfloat16)

    def pad_w(w, r, c):
        return jnp.pad(w, ((0, r - w.shape[0]),
                           (0, c - w.shape[1]))).astype(jnp.bfloat16)

    # [W_l | W_r] so both SAGEConv linear maps run as a single MXU pass.
    w1_cat = jnp.concatenate([pad_w(w1l, cin_p, hid_p),
                              pad_w(w1r, cin_p, hid_p)], axis=1)
    w2_cat = jnp.concatenate([pad_w(w2l, hid_p, out_p),
                              pad_w(w2r, hid_p, out_p)], axis=1)
    b1_row = jnp.pad(b1, (0, hid_p - hidden)).reshape(1, hid_p).astype(jnp.float32)
    b2_row = jnp.pad(b2, (0, out_p - out_ch)).reshape(1, out_p).astype(jnp.float32)

    # conv1 -> ReLU
    h = _sage_layer(a_i8, ids_flat, counts_dev, inv_deg_dev, x_pad, w1_cat,
                    b1_row, apply_relu=True, out_dtype=jnp.bfloat16,
                    tm=tm, tk=tk, max_cnt=max_cnt, nnz_blocks=nnz_blocks)
    # dropout (eval mode) -> identity
    # conv2
    out = _sage_layer(a_i8, ids_flat, counts_dev, inv_deg_dev, h, w2_cat,
                      b2_row, apply_relu=False, out_dtype=jnp.float32,
                      tm=tm, tk=tk, max_cnt=max_cnt, nnz_blocks=nnz_blocks)
    return out[:n, :out_ch]


# ---------------------------------------------------------------------------
# References (plain JAX) and parameter init
# ---------------------------------------------------------------------------
def _count_adj(n, edge_index):
    src, dst = edge_index[0], edge_index[1]
    adj = jnp.zeros((n, n), jnp.float32).at[dst, src].add(1.0)
    deg = jnp.sum(adj, axis=1, keepdims=True)
    return adj, deg


def reference_f32(x, edge_index, params):
    adj, deg = _count_adj(x.shape[0], edge_index)
    a = adj / jnp.maximum(deg, 1.0)
    w1l, w1r, b1, w2l, w2r, b2 = params
    h = jnp.maximum((a @ x) @ w1l + x @ w1r + b1, 0.0)
    return (a @ h) @ w2l + h @ w2r + b2


def reference_bf16(x, edge_index, params):
    """Mirrors the kernel's dtype flow: bf16 MXU inputs/P/S, f32 accumulation,
    integer 0/1 adjacency with an f32 per-row 1/deg scale, f32 epilogue."""
    bf, f32 = jnp.bfloat16, jnp.float32
    adj, deg = _count_adj(x.shape[0], edge_index)
    inv = 1.0 / jnp.maximum(deg, 1.0)
    a01 = adj.astype(bf)
    w1l, w1r, b1, w2l, w2r, b2 = params
    xb = x.astype(bf)
    p1 = jnp.dot(xb, w1l.astype(bf), preferred_element_type=f32).astype(bf)
    s1 = jnp.dot(xb, w1r.astype(bf), preferred_element_type=f32).astype(bf)
    h = jnp.maximum(inv * jnp.dot(a01, p1, preferred_element_type=f32)
                    + s1.astype(f32) + b1, 0.0).astype(bf)
    p2 = jnp.dot(h, w2l.astype(bf), preferred_element_type=f32).astype(bf)
    s2 = jnp.dot(h, w2r.astype(bf), preferred_element_type=f32).astype(bf)
    return (inv * jnp.dot(a01, p2, preferred_element_type=f32)
            + s2.astype(f32) + b2)


def init_params(key, in_channels, hidden_channels, out_channels):
    ks = jax.random.split(key, 6)

    def lin(k, fan_in, fan_out):
        bound = 1.0 / math.sqrt(fan_in)
        return jax.random.uniform(k, (fan_in, fan_out), jnp.float32, -bound, bound)

    w1l = lin(ks[0], in_channels, hidden_channels)
    w1r = lin(ks[1], in_channels, hidden_channels)
    b1 = jax.random.uniform(ks[2], (hidden_channels,), jnp.float32, -0.1, 0.1)
    w2l = lin(ks[3], hidden_channels, out_channels)
    w2r = lin(ks[4], hidden_channels, out_channels)
    b2 = jax.random.uniform(ks[5], (out_channels,), jnp.float32, -0.1, 0.1)
    return (w1l, w1r, b1, w2l, w2r, b2)


if __name__ == "__main__":
    key = jax.random.PRNGKey(0)
    k_x, k_s1, k_d1, k_s2, k_d2, k_p = jax.random.split(key, 6)

    num_nodes = 600          # rows pad to 1024 (tm=512), cols pad to 768 (tk=256)
    in_channels = 16
    hidden_channels = 32
    out_channels = 16

    x = jax.random.normal(k_x, (num_nodes, in_channels), jnp.float32)
    # Row tile 0 (dst < 512): sources anywhere -> column blocks {0,1,2} nonzero.
    # Row tile 1 (dst >= 512): sources only in [0,200) -> only column block 0,
    # so the kernel's data-dependent fetch + tail guard are exercised.
    src1 = jax.random.randint(k_s1, (3000,), 0, num_nodes, dtype=jnp.int32)
    dst1 = jax.random.randint(k_d1, (3000,), 0, 512, dtype=jnp.int32)
    src2 = jax.random.randint(k_s2, (1000,), 0, 200, dtype=jnp.int32)
    dst2 = jax.random.randint(k_d2, (1000,), 512, num_nodes, dtype=jnp.int32)
    edge_index = jnp.stack([jnp.concatenate([src1, src2]),
                            jnp.concatenate([dst1, dst2])])
    params = init_params(k_p, in_channels, hidden_channels, out_channels)

    out = jax.block_until_ready(sage_encoder(x, edge_index, params))
    assert out.shape == (num_nodes, out_channels)
    assert out.dtype == jnp.float32

    ref_b = reference_bf16(x, edge_index, params)
    ref_f = reference_f32(x, edge_index, params)
    assert jnp.allclose(out, ref_b, atol=1e-2, rtol=1e-2), \
        float(jnp.max(jnp.abs(out - ref_b)))
    assert jnp.allclose(out, ref_f, atol=2e-1, rtol=2e-1), \
        float(jnp.max(jnp.abs(out - ref_f)))

    print("KERNEL_OK")
</pallas_src>

<mosaic_0001>
module attributes {stable_mosaic.version = 11 : i64} {
  func.func @_sage_project_kernel(%arg0: i32, %arg1: memref<512x128xbf16, #tpu.memory_space<vmem>>, %arg2: memref<128x256xbf16, #tpu.memory_space<vmem>>, %arg3: memref<512x128xbf16, #tpu.memory_space<vmem>>, %arg4: memref<512x128xbf16, #tpu.memory_space<vmem>>) attributes {dimension_semantics = [#tpu.dimension_semantics<parallel>], iteration_bounds = array<i64: 2>, scalar_prefetch = 0 : i64, scratch_operands = 0 : i64, tpu.core_type = #tpu.core_type<tc>, window_params = [{transform_indices = @transform_0, window_bounds = array<i64: 512, 128>}, {pipeline_mode = #tpu.pipeline_mode<synchronous>, transform_indices = @transform_1, window_bounds = array<i64: 128, 256>}, {transform_indices = @transform_2, window_bounds = array<i64: 512, 128>}, {transform_indices = @transform_3, window_bounds = array<i64: 512, 128>}]} {
    %c0 = arith.constant 0 : index
    %c0_0 = arith.constant 0 : index
    %0 = vector.load %arg1[%c0, %c0_0] : memref<512x128xbf16, #tpu.memory_space<vmem>>, vector<512x128xbf16>
    %c0_1 = arith.constant 0 : index
    %c0_2 = arith.constant 0 : index
    %1 = vector.load %arg2[%c0_1, %c0_2] : memref<128x256xbf16, #tpu.memory_space<vmem>>, vector<128x256xbf16>
    %cst = arith.constant dense<0.000000e+00> : vector<512x256xf32>
    %2 = tpu.matmul %0, %1, %cst {dimension_numbers = #tpu.dot_dimension_numbers<[1], [0], [0], [1], [0, 0, 1, 1], [], []>} : vector<512x128xbf16>, vector<128x256xbf16>, vector<512x256xf32> -> vector<512x256xf32>
    %3 = vector.extract_strided_slice %2 {offsets = [0, 0], sizes = [512, 128], strides = [1, 1]} : vector<512x256xf32> to vector<512x128xf32>
    %4 = arith.truncf %3 : vector<512x128xf32> to vector<512x128xbf16>
    %c0_3 = arith.constant 0 : index
    %c0_4 = arith.constant 0 : index
    %5 = vector.load %arg3[%c0_3, %c0_4] : memref<512x128xbf16, #tpu.memory_space<vmem>>, vector<512x128xbf16>
    tpu.vector_store %arg3[%c0_3, %c0_4], %4 {strides = array<i32>} : memref<512x128xbf16, #tpu.memory_space<vmem>>, vector<512x128xbf16>,
    %6 = vector.extract_strided_slice %2 {offsets = [0, 128], sizes = [512, 128], strides = [1, 1]} : vector<512x256xf32> to vector<512x128xf32>
    %7 = arith.truncf %6 : vector<512x128xf32> to vector<512x128xbf16>
    %c0_5 = arith.constant 0 : index
    %c0_6 = arith.constant 0 : index
    %8 = vector.load %arg4[%c0_5, %c0_6] : memref<512x128xbf16, #tpu.memory_space<vmem>>, vector<512x128xbf16>
    tpu.vector_store %arg4[%c0_5, %c0_6], %7 {strides = array<i32>} : memref<512x128xbf16, #tpu.memory_space<vmem>>, vector<512x128xbf16>,
    return
  }
  func.func @transform_0(%arg0: i32) -> (i32, i32) {
    %c0_i32 = arith.constant 0 : i32
    %c0_i32_0 = arith.constant 0 : i32
    return %arg0, %c0_i32 : i32, i32
  }
  func.func @transform_1(%arg0: i32) -> (i32, i32) {
    %c0_i32 = arith.constant 0 : i32
    %c0_i32_0 = arith.constant 0 : i32
    %c0_i32_1 = arith.constant 0 : i32
    return %c0_i32, %c0_i32_0 : i32, i32
  }
  func.func @transform_2(%arg0: i32) -> (i32, i32) {
    %c0_i32 = arith.constant 0 : i32
    %c0_i32_0 = arith.constant 0 : i32
    return %arg0, %c0_i32 : i32, i32
  }
  func.func @transform_3(%arg0: i32) -> (i32, i32) {
    %c0_i32 = arith.constant 0 : i32
    %c0_i32_0 = arith.constant 0 : i32
    return %arg0, %c0_i32 : i32, i32
  }
}

</mosaic_0001>

<llo_original>
// kernel: tpu_custom_call.1
$region0: #{tpu_custom_call.1}
  #allocation0 [shape = 'u32[]', space=smem, size = 0x4, offset = 0x4, fixed_abs, tag = 'smem constant byte address 0x4 - core index']
  #allocation1 [shape = 'u32[72,128]{1,0:T(1,128)}', space=vmem, size = 0x9000, scoped, tag = 'internal scratch']
  %s0 = inlined_call_operand.hbm [shape: bf16[1024,128], index: 0, kind: input, shape index: {}]
  %s1 = inlined_call_operand.hbm [shape: bf16[128,256], index: 1, kind: input, shape index: {}]
  %s2 = inlined_call_operand.hbm [shape: bf16[1024,128], index: 2, kind: output, shape index: {0}]
  %s3 = inlined_call_operand.hbm [shape: bf16[1024,128], index: 3, kind: output, shape index: {1}]
  %4 = xla_tuple %s2, %s3
  %s5 = sld [smem:[#allocation0]]
  $region57: #{tpu_custom_call.1} parent=0
    _
  %s7 = ssub.s32 1, %s5
  %s8 = scalar_select 0, %s7, %s5
  $region1: #{tpu_custom_call.1} parent=0
    #allocation2 [shape = 'u8[262144]{0}', space=vmem, size = 0x40000, scoped, tag = 'input window, operand 0']
    #allocation3 [shape = 's32[2]{0}', space=sflag, size = 0x8, scoped, tag = 'scoped memory for tpu_custom_call.1']
    #allocation4 [shape = 's32[2]{0}', space=sflag, size = 0x8, scoped, tag = 'scoped memory for tpu_custom_call.1']
    #allocation5 [shape = 'u8[65536]{0}', space=vmem, size = 0x10000, scoped, tag = 'input window, operand 1, single buffered']
    #allocation6 [shape = 's32[1]{0}', space=sflag, size = 0x4, scoped, tag = 'scoped memory for tpu_custom_call.1']
    #allocation7 [shape = 'u8[262144]{0}', space=vmem, size = 0x40000, scoped, tag = 'output window, operand 0']
    #allocation8 [shape = 'u8[262144]{0}', space=vmem, size = 0x40000, scoped, tag = 'output window, operand 1']
    #allocation9 [shape = 's32[2]{0}', space=sflag, size = 0x8, scoped, tag = 'scoped memory for tpu_custom_call.1']
    %9 = vsyncpa [#allocation3], 0
    %s10 = scalar_lea.sflag [#allocation3], 1
    %11 = vsyncpa %s10, 0
    %12 = vsyncpa [#allocation6], 0
    %13 = vsyncpa [#allocation4], 0
    %s14 = scalar_lea.sflag [#allocation4], 1
    %15 = vsyncpa %s14, 0
    %16 = vsyncpa [#allocation9], 0
    %s17 = scalar_lea.sflag [#allocation9], 1
    %18 = vsyncpa %s17, 0
    loop: start=0, step=1, limit=4
    $region2: #{tpu_custom_call.1} parent=1 // loop_pre_header
      _
    $region3: #{tpu_custom_call.1} parent=1 // loop_header
      %s20 = sphi 0, %s24
      %p21 = scmp.ge.s32.totalorder %s20, 4
      %s30 = sphi 0, %s32
      %s33 = sphi 0, %s30
      %s34 = sphi 0, %s33
      %s50 = sphi 0, %s34
      %s54 = sphi 0, %s54
      %s56 = sphi 0, %s54
      %s57 = sphi 0, %s56
      %s71 = sphi 0, %s57
      %s77 = sphi 0, %s79
      %s80 = sphi 0, %s77
      %s81 = sphi 0, %s80
      %s97 = sphi 0, %s81
      %s103 = sphi 0, %s105
      %s106 = sphi 0, %s103
      %s107 = sphi 0, %s106
      %s123 = sphi 0, %s107
    $region4: #{tpu_custom_call.1} parent=1 // loop_header_branch
      %23 = sbr.rel (%p21) target = $region8
    $region5: #{tpu_custom_call.1} parent=1 // loop_body
      %s25 = ssub.s32 %s20, 1
      %s26 = ssub.s32 %s20, 2
      %s27 = sadd.s32 %s20, 1
      %s28 = ssub.s32 %s20, %s27
      %p29 = scmp.eq.s32.totalorder %s28, 0
      %s31 = sadd.s32 %s30, 1
      %s32 = scalar_select %p29, %s30, %s31
      %p35 = pneg %p29
      %p36 = scmp.eq.s32.totalorder %s20, 1
      %p37 = por %p35, %p36
      %p38 = scmp.ne.s32.totalorder %s30, %s33
      %p39 = scmp.eq.s32.totalorder %s20, 0
      %p40 = por %p38, %p39
      %p41 = scmp.ne.s32.totalorder %s30, %s33
      %p42 = scmp.eq.s32.totalorder %s25, 1
      %p43 = por %p41, %p42
      %p44 = scmp.ne.s32.totalorder %s33, %s34
      %p45 = scmp.eq.s32.totalorder %s25, 0
      %p46 = por %p44, %p45
      %p47 = scmp.ne.s32.totalorder %s33, %s34
      %p48 = scmp.eq.s32.totalorder %s26, 1
      %p49 = por %p47, %p48
      %p51 = scmp.ne.s32.totalorder %s34, %s50
      %p52 = scmp.eq.s32.totalorder %s26, 0
      %p53 = por %p51, %p52
      %s55 = sadd.s32 %s54, 1
      %p58 = scmp.eq.s32.totalorder %s20, 1
      %p59 = scmp.ne.s32.totalorder %s54, %s56
      %p60 = scmp.eq.s32.totalorder %s20, 0
      %p61 = por %p59, %p60
      %p62 = scmp.ne.s32.totalorder %s54, %s56
      %p63 = scmp.eq.s32.totalorder %s25, 1
      %p64 = por %p62, %p63
      %p65 = scmp.ne.s32.totalorder %s56, %s57
      %p66 = scmp.eq.s32.totalorder %s25, 0
      %p67 = por %p65, %p66
      %p68 = scmp.ne.s32.totalorder %s56, %s57
      %p69 = scmp.eq.s32.totalorder %s26, 1
      %p70 = por %p68, %p69
      %p72 = scmp.ne.s32.totalorder %s57, %s71
      %p73 = scmp.eq.s32.totalorder %s26, 0
      %p74 = por %p72, %p73
      %s75 = ssub.s32 %s20, %s27
      %p76 = scmp.eq.s32.totalorder %s75, 0
      %s78 = sadd.s32 %s77, 1
      %s79 = scalar_select %p76, %s77, %s78
      %p82 = pneg %p76
      %p83 = scmp.eq.s32.totalorder %s20, 1
      %p84 = por %p82, %p83
      %p85 = scmp.ne.s32.totalorder %s77, %s80
      %p86 = scmp.eq.s32.totalorder %s20, 0
      %p87 = por %p85, %p86
      %p88 = scmp.ne.s32.totalorder %s77, %s80
      %p89 = scmp.eq.s32.totalorder %s25, 1
      %p90 = por %p88, %p89
      %p91 = scmp.ne.s32.totalorder %s80, %s81
      %p92 = scmp.eq.s32.totalorder %s25, 0
      %p93 = por %p91, %p92
      %p94 = scmp.ne.s32.totalorder %s80, %s81
      %p95 = scmp.eq.s32.totalorder %s26, 1
      %p96 = por %p94, %p95
      %p98 = scmp.ne.s32.totalorder %s81, %s97
      %p99 = scmp.eq.s32.totalorder %s26, 0
      %p100 = por %p98, %p99
      %s101 = ssub.s32 %s20, %s27
      %p102 = scmp.eq.s32.totalorder %s101, 0
      %s104 = sadd.s32 %s103, 1
      %s105 = scalar_select %p102, %s103, %s104
      %p108 = pneg %p102
      %p109 = scmp.eq.s32.totalorder %s20, 1
      %p110 = por %p108, %p109
      %p111 = scmp.ne.s32.totalorder %s103, %s106
      %p112 = scmp.eq.s32.totalorder %s20, 0
      %p113 = por %p111, %p112
      %p114 = scmp.ne.s32.totalorder %s103, %s106
      %p115 = scmp.eq.s32.totalorder %s25, 1
      %p116 = por %p114, %p115
      %p117 = scmp.ne.s32.totalorder %s106, %s107
      %p118 = scmp.eq.s32.totalorder %s25, 0
      %p119 = por %p117, %p118
      %p120 = scmp.ne.s32.totalorder %s106, %s107
      %p121 = scmp.eq.s32.totalorder %s26, 1
      %p122 = por %p120, %p121
      %p124 = scmp.ne.s32.totalorder %s107, %s123
      %p125 = scmp.eq.s32.totalorder %s26, 0
      %p126 = por %p124, %p125
      %p127 = scmp.le.s32.totalorder 1, %s20
      %p128 = scmp.lt.s32.totalorder %s20, 3
      %p129 = pnand %p127, %p128
      %p130 = pneg %p129
      // Predicated region
      $region9: #{tpu_custom_call.1} parent=5 // pred_check
        _
      $region10: #{tpu_custom_call.1} parent=5 // pred_check_branch
        %132 = sbr.rel (%p129) target = $region12
      $region11: #{tpu_custom_call.1} parent=5 // pred_region
        %s133 = ssub.s32 %s20, 1
        // Predicated region
        $region13: #{tpu_custom_call.1} parent=11 // pred_check
          %p134 = pneg %p67
        $region14: #{tpu_custom_call.1} parent=11 // pred_check_branch
          %136 = sbr.rel (%p134) target = $region16
        $region15: #{tpu_custom_call.1} parent=11 // pred_region
          %138 = vsyncadd [#allocation6], 0
          %s139 = sshll.u32 %s1, 4
          %s140 = int_to_ptr.hbm [resolvable:$true] %s139
          %s141 = sshll.u32 [#allocation5], 4
          %s142 = int_to_ptr.vmem [resolvable:$true] %s141
          %147 = dma.hbm_to_vmem [thread:$0]  %s140, 2048, %s142, [#allocation6], 128, 128, 8
        $region16: #{tpu_custom_call.1} parent=11 // pred_fallthru
          _
      $region12: #{tpu_custom_call.1} parent=5 // pred_fallthru
        _
      %p148 = scmp.lt.s32.totalorder %s20, 2
      // Predicated region
      $region17: #{tpu_custom_call.1} parent=5 // pred_check
        %p149 = pneg %p148
      $region18: #{tpu_custom_call.1} parent=5 // pred_check_branch
        %151 = sbr.rel (%p149) target = $region20
      $region19: #{tpu_custom_call.1} parent=5 // pred_region
        // Predicated region
        $region21: #{tpu_custom_call.1} parent=19 // pred_check
          %p152 = pneg %p40
        $region22: #{tpu_custom_call.1} parent=19 // pred_check_branch
          %154 = sbr.rel (%p152) target = $region24
        $region23: #{tpu_custom_call.1} parent=19 // pred_region
          %s155 = sand.u32 %s30, 1
          %s156 = scalar_lea.sflag [#allocation3], %s155
          %s157 = sand.u32 %s30, 1
          %s158 = smul.addr %s157, 256
          %s159 = scalar_lea.vmem [#allocation2], %s158
          %s160 = smul.u32 64, %s20
          %162 = vsyncadd %s156, 0
          %s163 = smul.addr %s160, 4
          %s164 = scalar_lea.hbm %s0, %s163
          %s165 = sshll.u32 %s164, 4
          %s166 = int_to_ptr.hbm [resolvable:$true] %s165
          %s167 = sshll.u32 %s159, 4
          %s168 = int_to_ptr.vmem [resolvable:$true] %s167
          %173 = dma.hbm_to_vmem [thread:$0]  %s166, 4096, %s168, %s156, 64, 64, 4
        $region24: #{tpu_custom_call.1} parent=19 // pred_fallthru
          _
      $region20: #{tpu_custom_call.1} parent=5 // pred_fallthru
        _
      %p174 = scmp.le.s32.totalorder 1, %s20
      %p175 = scmp.lt.s32.totalorder %s20, 3
      %p176 = pnand %p174, %p175
      %p177 = pneg %p176
      // Predicated region
      $region25: #{tpu_custom_call.1} parent=5 // pred_check
        _
      $region26: #{tpu_custom_call.1} parent=5 // pred_check_branch
        %179 = sbr.rel (%p176) target = $region28
      $region27: #{tpu_custom_call.1} parent=5 // pred_region
        %s180 = ssub.s32 %s20, 1
        %s181 = sand.u32 %s33, 1
        %s182 = scalar_lea.sflag [#allocation3], %s181
        %s183 = sand.u32 %s33, 1
        %s184 = smul.addr %s183, 256
        %s185 = scalar_lea.vmem [#allocation2], %s184
        // Predicated region
        $region29: #{tpu_custom_call.1} parent=27 // pred_check
          %p186 = pneg %p46
        $region30: #{tpu_custom_call.1} parent=27 // pred_check_branch
          %188 = sbr.rel (%p186) target = $region32
        $region31: #{tpu_custom_call.1} parent=27 // pred_region
          %190 = dma.done %s182, 4096
        $region32: #{tpu_custom_call.1} parent=27 // pred_fallthru
          _
        // Predicated region
        $region33: #{tpu_custom_call.1} parent=27 // pred_check
          %p191 = pneg %p67
        $region34: #{tpu_custom_call.1} parent=27 // pred_check_branch
          %193 = sbr.rel (%p191) target = $region36
        $region35: #{tpu_custom_call.1} parent=27 // pred_region
          %195 = dma.done [#allocation6], 2048
        $region36: #{tpu_custom_call.1} parent=27 // pred_fallthru
          _
        %s196 = sand.u32 %s33, 1
        %s197 = scalar_lea.sflag [#allocation3], %s196
        %s198 = sand.u32 %s33, 1
        %s199 = smul.addr %s198, 256
        %s200 = scalar_lea.vmem [#allocation2], %s199
        %p201 = pneg %p46
        %p202 = pneg %p43
        %p203 = pneg %p67
        %p204 = pneg %p64
        %p205 = pneg %p93
        %p206 = pneg %p90
        %s207 = sand.u32 %s80, 1
        %s208 = scalar_lea.sflag [#allocation4], %s207
        %s209 = sand.u32 %s80, 1
        %s210 = smul.addr %s209, 256
        %s211 = scalar_lea.vmem [#allocation7], %s210
        %p212 = pneg %p119
        %p213 = pneg %p116
        %s214 = sand.u32 %s106, 1
        %s215 = scalar_lea.sflag [#allocation9], %s214
        %s216 = sand.u32 %s106, 1
        %s217 = smul.addr %s216, 256
        %s218 = scalar_lea.vmem [#allocation8], %s217
        %s219 = smul.u32 64, %s25
        %s220 = smul.u32 64, %s25
        %s221 = smul.u32 64, %s25
        %v222 = vld [vmem:[%s185] sm:$0xf]
        %v223 = vld [vmem:[%s185 + $0x4] sm:$0xf]
        %v224 = vld [vmem:[%s185 + $0x8] sm:$0xf]
        %v225 = vld [vmem:[%s185 + $0xc] sm:$0xf]
        %v226 = vld [vmem:[%s185 + $0x10] sm:$0xf]
        %v227 = vld [vmem:[%s185 + $0x14] sm:$0xf]
        %v228 = vld [vmem:[%s185 + $0x18] sm:$0xf]
        %v229 = vld [vmem:[%s185 + $0x1c] sm:$0xf]
        %v230 = vld [vmem:[%s185 + $0x20] sm:$0xf]
        %v231 = vld [vmem:[%s185 + $0x24] sm:$0xf]
        %v232 = vld [vmem:[%s185 + $0x28] sm:$0xf]
        %v233 = vld [vmem:[%s185 + $0x2c] sm:$0xf]
        %v234 = vld [vmem:[%s185 + $0x30] sm:$0xf]
        %v235 = vld [vmem:[%s185 + $0x34] sm:$0xf]
        %v236 = vld [vmem:[%s185 + $0x38] sm:$0xf]
        %v237 = vld [vmem:[%s185 + $0x3c] sm:$0xf]
        %v238 = vld [vmem:[%s185 + $0x40] sm:$0xf]
        %v239 = vld [vmem:[%s185 + $0x44] sm:$0xf]
        %v240 = vld [vmem:[%s185 + $0x48] sm:$0xf]
        %v241 = vld [vmem:[%s185 + $0x4c] sm:$0xf]
        %v242 = vld [vmem:[%s185 + $0x50] sm:$0xf]
        %v243 = vld [vmem:[%s185 + $0x54] sm:$0xf]
        %v244 = vld [vmem:[%s185 + $0x58] sm:$0xf]
        %v245 = vld [vmem:[%s185 + $0x5c] sm:$0xf]
        %v246 = vld [vmem:[%s185 + $0x60] sm:$0xf]
        %v247 = vld [vmem:[%s185 + $0x64] sm:$0xf]
        %v248 = vld [vmem:[%s185 + $0x68] sm:$0xf]
        %v249 = vld [vmem:[%s185 + $0x6c] sm:$0xf]
        %v250 = vld [vmem:[%s185 + $0x70] sm:$0xf]
        %v251 = vld [vmem:[%s185 + $0x74] sm:$0xf]
        %v252 = vld [vmem:[%s185 + $0x78] sm:$0xf]
        %v253 = vld [vmem:[%s185 + $0x7c] sm:$0xf]
        %v254 = vld [vmem:[%s185 + $0x80] sm:$0xf]
        %v255 = vld [vmem:[%s185 + $0x84] sm:$0xf]
        %v256 = vld [vmem:[%s185 + $0x88] sm:$0xf]
        %v257 = vld [vmem:[%s185 + $0x8c] sm:$0xf]
        %v258 = vld [vmem:[%s185 + $0x90] sm:$0xf]
        %v259 = vld [vmem:[%s185 + $0x94] sm:$0xf]
        %v260 = vld [vmem:[%s185 + $0x98] sm:$0xf]
        %v261 = vld [vmem:[%s185 + $0x9c] sm:$0xf]
        %v262 = vld [vmem:[%s185 + $0xa0] sm:$0xf]
        %v263 = vld [vmem:[%s185 + $0xa4] sm:$0xf]
        %v264 = vld [vmem:[%s185 + $0xa8] sm:$0xf]
        %v265 = vld [vmem:[%s185 + $0xac] sm:$0xf]
        %v266 = vld [vmem:[%s185 + $0xb0] sm:$0xf]
        %v267 = vld [vmem:[%s185 + $0xb4] sm:$0xf]
        %v268 = vld [vmem:[%s185 + $0xb8] sm:$0xf]
        %v269 = vld [vmem:[%s185 + $0xbc] sm:$0xf]
        %v270 = vld [vmem:[%s185 + $0xc0] sm:$0xf]
        %v271 = vld [vmem:[%s185 + $0xc4] sm:$0xf]
        %v272 = vld [vmem:[%s185 + $0xc8] sm:$0xf]
        %v273 = vld [vmem:[%s185 + $0xcc] sm:$0xf]
        %v274 = vld [vmem:[%s185 + $0xd0] sm:$0xf]
        %v275 = vld [vmem:[%s185 + $0xd4] sm:$0xf]
        %v276 = vld [vmem:[%s185 + $0xd8] sm:$0xf]
        %v277 = vld [vmem:[%s185 + $0xdc] sm:$0xf]
        %v278 = vld [vmem:[%s185 + $0xe0] sm:$0xf]
        %v279 = vld [vmem:[%s185 + $0xe4] sm:$0xf]
        %v280 = vld [vmem:[%s185 + $0xe8] sm:$0xf]
        %v281 = vld [vmem:[%s185 + $0xec] sm:$0xf]
        %v282 = vld [vmem:[%s185 + $0xf0] sm:$0xf]
        %v283 = vld [vmem:[%s185 + $0xf4] sm:$0xf]
        %v284 = vld [vmem:[%s185 + $0xf8] sm:$0xf]
        %v285 = vld [vmem:[%s185 + $0xfc] sm:$0xf]
        %v286 = vld [vmem:[#allocation5] sm:$0xff]
        %v287 = vld [vmem:[#allocation5 + $0x8] sm:$0xff]
        %v288 = vld [vmem:[#allocation5 + $0x10] sm:$0xff]
        %v289 = vld [vmem:[#allocation5 + $0x18] sm:$0xff]
        %v290 = vld [vmem:[#allocation5 + $0x20] sm:$0xff]
        %v291 = vld [vmem:[#allocation5 + $0x28] sm:$0xff]
        %v292 = vld [vmem:[#allocation5 + $0x30] sm:$0xff]
        %v293 = vld [vmem:[#allocation5 + $0x38] sm:$0xff]
        %v294 = vld [vmem:[#allocation5 + $0x40] sm:$0xff]
        %v295 = vld [vmem:[#allocation5 + $0x48] sm:$0xff]
        %v296 = vld [vmem:[#allocation5 + $0x50] sm:$0xff]
        %v297 = vld [vmem:[#allocation5 + $0x58] sm:$0xff]
        %v298 = vld [vmem:[#allocation5 + $0x60] sm:$0xff]
        %v299 = vld [vmem:[#allocation5 + $0x68] sm:$0xff]
        %v300 = vld [vmem:[#allocation5 + $0x70] sm:$0xff]
        %v301 = vld [vmem:[#allocation5 + $0x78] sm:$0xff]
        %v366 = vunpack.c.l.b16 %v222
        %v367 = vunpack.c.l.b16 %v223
        %v368 = vunpack.c.l.b16 %v224
        %v369 = vunpack.c.l.b16 %v225
        %v370 = vunpack.c.l.b16 %v226
        %v371 = vunpack.c.l.b16 %v227
        %v372 = vunpack.c.l.b16 %v228
        %v373 = vunpack.c.l.b16 %v229
        %v374 = vunpack.c.l.b16 %v230
        %v375 = vunpack.c.l.b16 %v231
        %v376 = vunpack.c.l.b16 %v232
        %v377 = vunpack.c.l.b16 %v233
        %v378 = vunpack.c.l.b16 %v234
        %v379 = vunpack.c.l.b16 %v235
        %v380 = vunpack.c.l.b16 %v236
        %v381 = vunpack.c.l.b16 %v237
        %v382 = vunpack.c.l.b16 %v238
        %v383 = vunpack.c.l.b16 %v239
        %v384 = vunpack.c.l.b16 %v240
        %v385 = vunpack.c.l.b16 %v241
        %v386 = vunpack.c.l.b16 %v242
        %v387 = vunpack.c.l.b16 %v243
        %v388 = vunpack.c.l.b16 %v244
        %v389 = vunpack.c.l.b16 %v245
        %v390 = vunpack.c.l.b16 %v246
        %v391 = vunpack.c.l.b16 %v247
        %v392 = vunpack.c.l.b16 %v248
        %v393 = vunpack.c.l.b16 %v249
        %v394 = vunpack.c.l.b16 %v250
        %v395 = vunpack.c.l.b16 %v251
        %v396 = vunpack.c.l.b16 %v252
        %v397 = vunpack.c.l.b16 %v253
        %v398 = vunpack.c.l.b16 %v254
        %v399 = vunpack.c.l.b16 %v255
        %v400 = vunpack.c.l.b16 %v256
        %v401 = vunpack.c.l.b16 %v257
        %v402 = vunpack.c.l.b16 %v258
        %v403 = vunpack.c.l.b16 %v259
        %v404 = vunpack.c.l.b16 %v260
        %v405 = vunpack.c.l.b16 %v261
        %v406 = vunpack.c.l.b16 %v262
        %v407 = vunpack.c.l.b16 %v263
        %v408 = vunpack.c.l.b16 %v264
        %v409 = vunpack.c.l.b16 %v265
        %v410 = vunpack.c.l.b16 %v266
        %v411 = vunpack.c.l.b16 %v267
        %v412 = vunpack.c.l.b16 %v268
        %v413 = vunpack.c.l.b16 %v269
        %v414 = vunpack.c.l.b16 %v270
        %v415 = vunpack.c.l.b16 %v271
        %v416 = vunpack.c.l.b16 %v272
        %v417 = vunpack.c.l.b16 %v273
        %v418 = vunpack.c.l.b16 %v274
        %v419 = vunpack.c.l.b16 %v275
        %v420 = vunpack.c.l.b16 %v276
        %v421 = vunpack.c.l.b16 %v277
        %v422 = vunpack.c.l.b16 %v278
        %v423 = vunpack.c.l.b16 %v279
        %v424 = vunpack.c.l.b16 %v280
        %v425 = vunpack.c.l.b16 %v281
        %v426 = vunpack.c.l.b16 %v282
        %v427 = vunpack.c.l.b16 %v283
        %v428 = vunpack.c.l.b16 %v284
        %v429 = vunpack.c.l.b16 %v285
        %v430 = vpack.c.b16 %v367, %v366
        %v431 = vpack.c.b16 %v369, %v368
        %v432 = vpack.c.b16 %v371, %v370
        %v433 = vpack.c.b16 %v373, %v372
        %v434 = vpack.c.b16 %v375, %v374
        %v435 = vpack.c.b16 %v377, %v376
        %v436 = vpack.c.b16 %v379, %v378
        %v437 = vpack.c.b16 %v381, %v380
        %v438 = vpack.c.b16 %v383, %v382
        %v439 = vpack.c.b16 %v385, %v384
        %v440 = vpack.c.b16 %v387, %v386
        %v441 = vpack.c.b16 %v389, %v388
        %v442 = vpack.c.b16 %v391, %v390
        %v443 = vpack.c.b16 %v393, %v392
        %v444 = vpack.c.b16 %v395, %v394
        %v445 = vpack.c.b16 %v397, %v396
        %v446 = vpack.c.b16 %v399, %v398
        %v447 = vpack.c.b16 %v401, %v400
        %v448 = vpack.c.b16 %v403, %v402
        %v449 = vpack.c.b16 %v405, %v404
        %v450 = vpack.c.b16 %v407, %v406
        %v451 = vpack.c.b16 %v409, %v408
        %v452 = vpack.c.b16 %v411, %v410
        %v453 = vpack.c.b16 %v413, %v412
        %v454 = vpack.c.b16 %v415, %v414
        %v455 = vpack.c.b16 %v417, %v416
        %v456 = vpack.c.b16 %v419, %v418
        %v457 = vpack.c.b16 %v421, %v420
        %v458 = vpack.c.b16 %v423, %v422
        %v459 = vpack.c.b16 %v425, %v424
        %v460 = vpack.c.b16 %v427, %v426
        %v461 = vpack.c.b16 %v429, %v428
        %v510 = vunpack.c.l.b16 %v286
        %v511 = vunpack.c.h.b16 %v286
        %v512 = vunpack.c.l.b16 %v287
        %v513 = vunpack.c.h.b16 %v287
        %v514 = vunpack.c.l.b16 %v288
        %v515 = vunpack.c.h.b16 %v288
        %v516 = vunpack.c.l.b16 %v289
        %v517 = vunpack.c.h.b16 %v289
        %v518 = vunpack.c.l.b16 %v290
        %v519 = vunpack.c.h.b16 %v290
        %v520 = vunpack.c.l.b16 %v291
        %v521 = vunpack.c.h.b16 %v291
        %v522 = vunpack.c.l.b16 %v292
        %v523 = vunpack.c.h.b16 %v292
        %v524 = vunpack.c.l.b16 %v293
        %v525 = vunpack.c.h.b16 %v293
        %v526 = vunpack.c.l.b16 %v294
        %v527 = vunpack.c.h.b16 %v294
        %v528 = vunpack.c.l.b16 %v295
        %v529 = vunpack.c.h.b16 %v295
        %v530 = vunpack.c.l.b16 %v296
        %v531 = vunpack.c.h.b16 %v296
        %v532 = vunpack.c.l.b16 %v297
        %v533 = vunpack.c.h.b16 %v297
        %v534 = vunpack.c.l.b16 %v298
        %v535 = vunpack.c.h.b16 %v298
        %v536 = vunpack.c.l.b16 %v299
        %v537 = vunpack.c.h.b16 %v299
        %v538 = vunpack.c.l.b16 %v300
        %v539 = vunpack.c.h.b16 %v300
        %v540 = vunpack.c.l.b16 %v301
        %v541 = vunpack.c.h.b16 %v301
        %v542 = vpack.c.b16 %v512, %v510
        %v543 = vpack.c.b16 %v513, %v511
        %v544 = vpack.c.b16 %v516, %v514
        %v545 = vpack.c.b16 %v517, %v515
        %v546 = vpack.c.b16 %v520, %v518
        %v547 = vpack.c.b16 %v521, %v519
        %v548 = vpack.c.b16 %v524, %v522
        %v549 = vpack.c.b16 %v525, %v523
        %v550 = vpack.c.b16 %v528, %v526
        %v551 = vpack.c.b16 %v529, %v527
        %v552 = vpack.c.b16 %v532, %v530
        %v553 = vpack.c.b16 %v533, %v531
        %v554 = vpack.c.b16 %v536, %v534
        %v555 = vpack.c.b16 %v537, %v535
        %v556 = vpack.c.b16 %v540, %v538
        %v557 = vpack.c.b16 %v541, %v539
        %574 = vmatpush.bf16.msra.mxu0 %v556
        %575 = vmatpush.bf16.msra.mxu0 %v554
        %576 = vmatpush.bf16.msra.mxu0 %v552
        %577 = vmatpush.bf16.msra.mxu0 %v550
        %578 = vmatpush.bf16.msra.mxu0 %v548
        %579 = vmatpush.bf16.msra.mxu0 %v546
        %580 = vmatpush.bf16.msra.mxu0 %v544
        %581 = vmatpush.bf16.msra.mxu0 %v542
        %582 = vmatmul.bf16.gmra.mxu0 %v430
        %v583 = vpop.f32.mrf.mxu0
        %v584 = vadd.f32 0.0, %v583
        %v585 = vpop.f32.mrf.mxu0
        %v586 = vadd.f32 0.0, %v585
        %587 = vmatmul.bf16.gmra.mxu0 %v431
        %v588 = vpop.f32.mrf.mxu0
        %v589 = vadd.f32 0.0, %v588
        %v590 = vpop.f32.mrf.mxu0
        %v591 = vadd.f32 0.0, %v590
        %592 = vmatmul.bf16.gmra.mxu0 %v432
        %v593 = vpop.f32.mrf.mxu0
        %v594 = vadd.f32 0.0, %v593
        %v595 = vpop.f32.mrf.mxu0
        %v596 = vadd.f32 0.0, %v595
        %597 = vmatmul.bf16.gmra.mxu0 %v433
        %v598 = vpop.f32.mrf.mxu0
        %v599 = vadd.f32 0.0, %v598
        %v600 = vpop.f32.mrf.mxu0
        %v601 = vadd.f32 0.0, %v600
        %602 = vmatmul.bf16.gmra.mxu0 %v434
        %v603 = vpop.f32.mrf.mxu0
        %v604 = vadd.f32 0.0, %v603
        %v605 = vpop.f32.mrf.mxu0
        %v606 = vadd.f32 0.0, %v605
        %607 = vmatmul.bf16.gmra.mxu0 %v435
        %v608 = vpop.f32.mrf.mxu0
        %v609 = vadd.f32 0.0, %v608
        %v610 = vpop.f32.mrf.mxu0
        %v611 = vadd.f32 0.0, %v610
        %612 = vmatmul.bf16.gmra.mxu0 %v436
        %v613 = vpop.f32.mrf.mxu0
        %v614 = vadd.f32 0.0, %v613
        %v615 = vpop.f32.mrf.mxu0
        %v616 = vadd.f32 0.0, %v615
        %617 = vmatmul.bf16.gmra.mxu0 %v437
        %v618 = vpop.f32.mrf.mxu0
        %v619 = vadd.f32 0.0, %v618
        %v620 = vpop.f32.mrf.mxu0
        %v621 = vadd.f32 0.0, %v620
        %622 = vmatmul.bf16.gmra.mxu0 %v438
        %v623 = vpop.f32.mrf.mxu0
        %v624 = vadd.f32 0.0, %v623
        %v625 = vpop.f32.mrf.mxu0
        %v626 = vadd.f32 0.0, %v625
        %627 = vmatmul.bf16.gmra.mxu0 %v439
        %v628 = vpop.f32.mrf.mxu0
        %v629 = vadd.f32 0.0, %v628
        %v630 = vpop.f32.mrf.mxu0
        %v631 = vadd.f32 0.0, %v630
        %632 = vmatmul.bf16.gmra.mxu0 %v440
        %v633 = vpop.f32.mrf.mxu0
        %v634 = vadd.f32 0.0, %v633
        %v635 = vpop.f32.mrf.mxu0
        %v636 = vadd.f32 0.0, %v635
        %637 = vmatmul.bf16.gmra.mxu0 %v441
        %v638 = vpop.f32.mrf.mxu0
        %v639 = vadd.f32 0.0, %v638
        %v640 = vpop.f32.mrf.mxu0
        %v641 = vadd.f32 0.0, %v640
        %642 = vmatmul.bf16.gmra.mxu0 %v442
        %v643 = vpop.f32.mrf.mxu0
        %v644 = vadd.f32 0.0, %v643
        %v645 = vpop.f32.mrf.mxu0
        %v646 = vadd.f32 0.0, %v645
        %647 = vmatmul.bf16.gmra.mxu0 %v443
        %v648 = vpop.f32.mrf.mxu0
        %v649 = vadd.f32 0.0, %v648
        %v650 = vpop.f32.mrf.mxu0
        %v651 = vadd.f32 0.0, %v650
        %652 = vmatmul.bf16.gmra.mxu0 %v444
        %v653 = vpop.f32.mrf.mxu0
        %v654 = vadd.f32 0.0, %v653
        %v655 = vpop.f32.mrf.mxu0
        %v656 = vadd.f32 0.0, %v655
        %657 = vmatmul.bf16.gmra.mxu0 %v445
        %v658 = vpop.f32.mrf.mxu0
        %v659 = vadd.f32 0.0, %v658
        %v660 = vpop.f32.mrf.mxu0
        %v661 = vadd.f32 0.0, %v660
        %662 = vmatmul.bf16.gmra.mxu0 %v446
        %v663 = vpop.f32.mrf.mxu0
        %v664 = vadd.f32 0.0, %v663
        %v665 = vpop.f32.mrf.mxu0
        %v666 = vadd.f32 0.0, %v665
        %667 = vmatmul.bf16.gmra.mxu0 %v447
        %v668 = vpop.f32.mrf.mxu0
        %v669 = vadd.f32 0.0, %v668
        %v670 = vpop.f32.mrf.mxu0
        %v671 = vadd.f32 0.0, %v670
        %672 = vmatmul.bf16.gmra.mxu0 %v448
        %v673 = vpop.f32.mrf.mxu0
        %v674 = vadd.f32 0.0, %v673
        %v675 = vpop.f32.mrf.mxu0
        %v676 = vadd.f32 0.0, %v675
        %677 = vmatmul.bf16.gmra.mxu0 %v449
        %v678 = vpop.f32.mrf.mxu0
        %v679 = vadd.f32 0.0, %v678
        %v680 = vpop.f32.mrf.mxu0
        %v681 = vadd.f32 0.0, %v680
        %682 = vmatmul.bf16.gmra.mxu0 %v450
        %v683 = vpop.f32.mrf.mxu0
        %v684 = vadd.f32 0.0, %v683
        %v685 = vpop.f32.mrf.mxu0
        %v686 = vadd.f32 0.0, %v685
        %687 = vmatmul.bf16.gmra.mxu0 %v451
        %v688 = vpop.f32.mrf.mxu0
        %v689 = vadd.f32 0.0, %v688
        %v690 = vpop.f32.mrf.mxu0
        %v691 = vadd.f32 0.0, %v690
        %692 = vmatmul.bf16.gmra.mxu0 %v452
        %v693 = vpop.f32.mrf.mxu0
        %v694 = vadd.f32 0.0, %v693
        %v695 = vpop.f32.mrf.mxu0
        %v696 = vadd.f32 0.0, %v695
        %697 = vmatmul.bf16.gmra.mxu0 %v453
        %v698 = vpop.f32.mrf.mxu0
        %v699 = vadd.f32 0.0, %v698
        %v700 = vpop.f32.mrf.mxu0
        %v701 = vadd.f32 0.0, %v700
        %702 = vmatmul.bf16.gmra.mxu0 %v454
        %v703 = vpop.f32.mrf.mxu0
        %v704 = vadd.f32 0.0, %v703
        %v705 = vpop.f32.mrf.mxu0
        %v706 = vadd.f32 0.0, %v705
        %707 = vmatmul.bf16.gmra.mxu0 %v455
        %v708 = vpop.f32.mrf.mxu0
        %v709 = vadd.f32 0.0, %v708
        %v710 = vpop.f32.mrf.mxu0
        %v711 = vadd.f32 0.0, %v710
        %712 = vmatmul.bf16.gmra.mxu0 %v456
        %v713 = vpop.f32.mrf.mxu0
        %v714 = vadd.f32 0.0, %v713
        %v715 = vpop.f32.mrf.mxu0
        %v716 = vadd.f32 0.0, %v715
        %717 = vmatmul.bf16.gmra.mxu0 %v457
        %v718 = vpop.f32.mrf.mxu0
        %v719 = vadd.f32 0.0, %v718
        %v720 = vpop.f32.mrf.mxu0
        %v721 = vadd.f32 0.0, %v720
        %722 = vmatmul.bf16.gmra.mxu0 %v458
        %v723 = vpop.f32.mrf.mxu0
        %v724 = vadd.f32 0.0, %v723
        %v725 = vpop.f32.mrf.mxu0
        %v726 = vadd.f32 0.0, %v725
        %727 = vmatmul.bf16.gmra.mxu0 %v459
        %v728 = vpop.f32.mrf.mxu0
        %v729 = vadd.f32 0.0, %v728
        %v730 = vpop.f32.mrf.mxu0
        %v731 = vadd.f32 0.0, %v730
        %732 = vmatmul.bf16.gmra.mxu0 %v460
        %v733 = vpop.f32.mrf.mxu0
        %v734 = vadd.f32 0.0, %v733
        %v735 = vpop.f32.mrf.mxu0
        %v736 = vadd.f32 0.0, %v735
        %737 = vmatmul.bf16.gmra.mxu0 %v461
        %v738 = vpop.f32.mrf.mxu0
        %v739 = vadd.f32 0.0, %v738
        %v740 = vpop.f32.mrf.mxu0
        %v741 = vadd.f32 0.0, %v740
        %742 = vdwg.mxu0
        %743 = vmatpush.bf16.msra.mxu0 %v557
        %744 = vmatpush.bf16.msra.mxu0 %v555
        %745 = vmatpush.bf16.msra.mxu0 %v553
        %746 = vmatpush.bf16.msra.mxu0 %v551
        %747 = vmatpush.bf16.msra.mxu0 %v549
        %748 = vmatpush.bf16.msra.mxu0 %v547
        %749 = vmatpush.bf16.msra.mxu0 %v545
        %750 = vmatpush.bf16.msra.mxu0 %v543
        %751 = vmatmul.bf16.gmra.mxu0 %v430
        %v752 = vpop.f32.mrf.mxu0
        %v753 = vadd.f32 0.0, %v752
        %v754 = vpop.f32.mrf.mxu0
        %v755 = vadd.f32 0.0, %v754
        %756 = vmatmul.bf16.gmra.mxu0 %v431
        %v757 = vpop.f32.mrf.mxu0
        %v758 = vadd.f32 0.0, %v757
        %v759 = vpop.f32.mrf.mxu0
        %v760 = vadd.f32 0.0, %v759
        %761 = vmatmul.bf16.gmra.mxu0 %v432
        %v762 = vpop.f32.mrf.mxu0
        %v763 = vadd.f32 0.0, %v762
        %v764 = vpop.f32.mrf.mxu0
        %v765 = vadd.f32 0.0, %v764
        %766 = vmatmul.bf16.gmra.mxu0 %v433
        %v767 = vpop.f32.mrf.mxu0
        %v768 = vadd.f32 0.0, %v767
        %v769 = vpop.f32.mrf.mxu0
        %v770 = vadd.f32 0.0, %v769
        %771 = vmatmul.bf16.gmra.mxu0 %v434
        %v772 = vpop.f32.mrf.mxu0
        %v773 = vadd.f32 0.0, %v772
        %v774 = vpop.f32.mrf.mxu0
        %v775 = vadd.f32 0.0, %v774
        %776 = vmatmul.bf16.gmra.mxu0 %v435
        %v777 = vpop.f32.mrf.mxu0
        %v778 = vadd.f32 0.0, %v777
        %v779 = vpop.f32.mrf.mxu0
        %v780 = vadd.f32 0.0, %v779
        %781 = vmatmul.bf16.gmra.mxu0 %v436
        %v782 = vpop.f32.mrf.mxu0
        %v783 = vadd.f32 0.0, %v782
        %v784 = vpop.f32.mrf.mxu0
        %v785 = vadd.f32 0.0, %v784
        %786 = vmatmul.bf16.gmra.mxu0 %v437
        %v787 = vpop.f32.mrf.mxu0
        %v788 = vadd.f32 0.0, %v787
        %v789 = vpop.f32.mrf.mxu0
        %v790 = vadd.f32 0.0, %v789
        %791 = vmatmul.bf16.gmra.mxu0 %v438
        %v792 = vpop.f32.mrf.mxu0
        %v793 = vadd.f32 0.0, %v792
        %v794 = vpop.f32.mrf.mxu0
        %v795 = vadd.f32 0.0, %v794
        %796 = vmatmul.bf16.gmra.mxu0 %v439
        %v797 = vpop.f32.mrf.mxu0
        %v798 = vadd.f32 0.0, %v797
        %v799 = vpop.f32.mrf.mxu0
        %v800 = vadd.f32 0.0, %v799
        %801 = vmatmul.bf16.gmra.mxu0 %v440
        %v802 = vpop.f32.mrf.mxu0
        %v803 = vadd.f32 0.0, %v802
        %v804 = vpop.f32.mrf.mxu0
        %v805 = vadd.f32 0.0, %v804
        %806 = vmatmul.bf16.gmra.mxu0 %v441
        %v807 = vpop.f32.mrf.mxu0
        %v808 = vadd.f32 0.0, %v807
        %v809 = vpop.f32.mrf.mxu0
        %v810 = vadd.f32 0.0, %v809
        %811 = vmatmul.bf16.gmra.mxu0 %v442
        %v812 = vpop.f32.mrf.mxu0
        %v813 = vadd.f32 0.0, %v812
        %v814 = vpop.f32.mrf.mxu0
        %v815 = vadd.f32 0.0, %v814
        %816 = vmatmul.bf16.gmra.mxu0 %v443
        %v817 = vpop.f32.mrf.mxu0
        %v818 = vadd.f32 0.0, %v817
        %v819 = vpop.f32.mrf.mxu0
        %v820 = vadd.f32 0.0, %v819
        %821 = vmatmul.bf16.gmra.mxu0 %v444
        %v822 = vpop.f32.mrf.mxu0
        %v823 = vadd.f32 0.0, %v822
        %v824 = vpop.f32.mrf.mxu0
        %v825 = vadd.f32 0.0, %v824
        %826 = vmatmul.bf16.gmra.mxu0 %v445
        %v827 = vpop.f32.mrf.mxu0
        %v828 = vadd.f32 0.0, %v827
        %v829 = vpop.f32.mrf.mxu0
        %v830 = vadd.f32 0.0, %v829
        %831 = vmatmul.bf16.gmra.mxu0 %v446
        %v832 = vpop.f32.mrf.mxu0
        %v833 = vadd.f32 0.0, %v832
        %v834 = vpop.f32.mrf.mxu0
        %v835 = vadd.f32 0.0, %v834
        %836 = vmatmul.bf16.gmra.mxu0 %v447
        %v837 = vpop.f32.mrf.mxu0
        %v838 = vadd.f32 0.0, %v837
        %v839 = vpop.f32.mrf.mxu0
        %v840 = vadd.f32 0.0, %v839
        %841 = vmatmul.bf16.gmra.mxu0 %v448
        %v842 = vpop.f32.mrf.mxu0
        %v843 = vadd.f32 0.0, %v842
        %v844 = vpop.f32.mrf.mxu0
        %v845 = vadd.f32 0.0, %v844
        %846 = vmatmul.bf16.gmra.mxu0 %v449
        %v847 = vpop.f32.mrf.mxu0
        %v848 = vadd.f32 0.0, %v847
        %v849 = vpop.f32.mrf.mxu0
        %v850 = vadd.f32 0.0, %v849
        %851 = vmatmul.bf16.gmra.mxu0 %v450
        %v852 = vpop.f32.mrf.mxu0
        %v853 = vadd.f32 0.0, %v852
        %v854 = vpop.f32.mrf.mxu0
        %v855 = vadd.f32 0.0, %v854
        %856 = vmatmul.bf16.gmra.mxu0 %v451
        %v857 = vpop.f32.mrf.mxu0
        %v858 = vadd.f32 0.0, %v857
        %v859 = vpop.f32.mrf.mxu0
        %v860 = vadd.f32 0.0, %v859
        %861 = vmatmul.bf16.gmra.mxu0 %v452
        %v862 = vpop.f32.mrf.mxu0
        %v863 = vadd.f32 0.0, %v862
        %v864 = vpop.f32.mrf.mxu0
        %v865 = vadd.f32 0.0, %v864
        %866 = vmatmul.bf16.gmra.mxu0 %v453
        %v867 = vpop.f32.mrf.mxu0
        %v868 = vadd.f32 0.0, %v867
        %v869 = vpop.f32.mrf.mxu0
        %v870 = vadd.f32 0.0, %v869
        %871 = vmatmul.bf16.gmra.mxu0 %v454
        %v872 = vpop.f32.mrf.mxu0
        %v873 = vadd.f32 0.0, %v872
        %v874 = vpop.f32.mrf.mxu0
        %v875 = vadd.f32 0.0, %v874
        %876 = vmatmul.bf16.gmra.mxu0 %v455
        %v877 = vpop.f32.mrf.mxu0
        %v878 = vadd.f32 0.0, %v877
        %v879 = vpop.f32.mrf.mxu0
        %v880 = vadd.f32 0.0, %v879
        %881 = vmatmul.bf16.gmra.mxu0 %v456
        %v882 = vpop.f32.mrf.mxu0
        %v883 = vadd.f32 0.0, %v882
        %v884 = vpop.f32.mrf.mxu0
        %v885 = vadd.f32 0.0, %v884
        %886 = vmatmul.bf16.gmra.mxu0 %v457
        %v887 = vpop.f32.mrf.mxu0
        %v888 = vadd.f32 0.0, %v887
        %v889 = vpop.f32.mrf.mxu0
        %v890 = vadd.f32 0.0, %v889
        %891 = vmatmul.bf16.gmra.mxu0 %v458
        %v892 = vpop.f32.mrf.mxu0
        %v893 = vadd.f32 0.0, %v892
        %v894 = vpop.f32.mrf.mxu0
        %v895 = vadd.f32 0.0, %v894
        %896 = vmatmul.bf16.gmra.mxu0 %v459
        %v897 = vpop.f32.mrf.mxu0
        %v898 = vadd.f32 0.0, %v897
        %v899 = vpop.f32.mrf.mxu0
        %v900 = vadd.f32 0.0, %v899
        %901 = vmatmul.bf16.gmra.mxu0 %v460
        %v902 = vpop.f32.mrf.mxu0
        %v903 = vadd.f32 0.0, %v902
        %v904 = vpop.f32.mrf.mxu0
        %v905 = vadd.f32 0.0, %v904
        %906 = vmatmul.bf16.gmra.mxu0 %v461
        %v907 = vpop.f32.mrf.mxu0
        %v908 = vadd.f32 0.0, %v907
        %v909 = vpop.f32.mrf.mxu0
        %v910 = vadd.f32 0.0, %v909
        %911 = vdwg.mxu0
        %v912 = vpack.c.bf16 %v584, %v584
        %v913 = vpack.c.bf16 %v586, %v586
        %v914 = vpack.c.bf16 %v589, %v589
        %v915 = vpack.c.bf16 %v591, %v591
        %v916 = vpack.c.bf16 %v594, %v594
        %v917 = vpack.c.bf16 %v596, %v596
        %v918 = vpack.c.bf16 %v599, %v599
        %v919 = vpack.c.bf16 %v601, %v601
        %v920 = vpack.c.bf16 %v604, %v604
        %v921 = vpack.c.bf16 %v606, %v606
        %v922 = vpack.c.bf16 %v609, %v609
        %v923 = vpack.c.bf16 %v611, %v611
        %v924 = vpack.c.bf16 %v614, %v614
        %v925 = vpack.c.bf16 %v616, %v616
        %v926 = vpack.c.bf16 %v619, %v619
        %v927 = vpack.c.bf16 %v621, %v621
        %v928 = vpack.c.bf16 %v624, %v624
        %v929 = vpack.c.bf16 %v626, %v626
        %v930 = vpack.c.bf16 %v629, %v629
        %v931 = vpack.c.bf16 %v631, %v631
        %v932 = vpack.c.bf16 %v634, %v634
        %v933 = vpack.c.bf16 %v636, %v636
        %v934 = vpack.c.bf16 %v639, %v639
        %v935 = vpack.c.bf16 %v641, %v641
        %v936 = vpack.c.bf16 %v644, %v644
        %v937 = vpack.c.bf16 %v646, %v646
        %v938 = vpack.c.bf16 %v649, %v649
        %v939 = vpack.c.bf16 %v651, %v651
        %v940 = vpack.c.bf16 %v654, %v654
        %v941 = vpack.c.bf16 %v656, %v656
        %v942 = vpack.c.bf16 %v659, %v659
        %v943 = vpack.c.bf16 %v661, %v661
        %v944 = vpack.c.bf16 %v664, %v664
        %v945 = vpack.c.bf16 %v666, %v666
        %v946 = vpack.c.bf16 %v669, %v669
        %v947 = vpack.c.bf16 %v671, %v671
        %v948 = vpack.c.bf16 %v674, %v674
        %v949 = vpack.c.bf16 %v676, %v676
        %v950 = vpack.c.bf16 %v679, %v679
        %v951 = vpack.c.bf16 %v681, %v681
        %v952 = vpack.c.bf16 %v684, %v684
        %v953 = vpack.c.bf16 %v686, %v686
        %v954 = vpack.c.bf16 %v689, %v689
        %v955 = vpack.c.bf16 %v691, %v691
        %v956 = vpack.c.bf16 %v694, %v694
        %v957 = vpack.c.bf16 %v696, %v696
        %v958 = vpack.c.bf16 %v699, %v699
        %v959 = vpack.c.bf16 %v701, %v701
        %v960 = vpack.c.bf16 %v704, %v704
        %v961 = vpack.c.bf16 %v706, %v706
        %v962 = vpack.c.bf16 %v709, %v709
        %v963 = vpack.c.bf16 %v711, %v711
        %v964 = vpack.c.bf16 %v714, %v714
        %v965 = vpack.c.bf16 %v716, %v716
        %v966 = vpack.c.bf16 %v719, %v719
        %v967 = vpack.c.bf16 %v721, %v721
        %v968 = vpack.c.bf16 %v724, %v724
        %v969 = vpack.c.bf16 %v726, %v726
        %v970 = vpack.c.bf16 %v729, %v729
        %v971 = vpack.c.bf16 %v731, %v731
        %v972 = vpack.c.bf16 %v734, %v734
        %v973 = vpack.c.bf16 %v736, %v736
        %v974 = vpack.c.bf16 %v739, %v739
        %v975 = vpack.c.bf16 %v741, %v741
        %976 = vst [vmem:[%s211] sm:$0xf] %v912
        %977 = vst [vmem:[%s211 + $0x4] sm:$0xf] %v913
        %978 = vst [vmem:[%s211 + $0x8] sm:$0xf] %v914
        %979 = vst [vmem:[%s211 + $0xc] sm:$0xf] %v915
        %980 = vst [vmem:[%s211 + $0x10] sm:$0xf] %v916
        %981 = vst [vmem:[%s211 + $0x14] sm:$0xf] %v917
        %982 = vst [vmem:[%s211 + $0x18] sm:$0xf] %v918
        %983 = vst [vmem:[%s211 + $0x1c] sm:$0xf] %v919
        %984 = vst [vmem:[%s211 + $0x20] sm:$0xf] %v920
        %985 = vst [vmem:[%s211 + $0x24] sm:$0xf] %v921
        %986 = vst [vmem:[%s211 + $0x28] sm:$0xf] %v922
        %987 = vst [vmem:[%s211 + $0x2c] sm:$0xf] %v923
        %988 = vst [vmem:[%s211 + $0x30] sm:$0xf] %v924
        %989 = vst [vmem:[%s211 + $0x34] sm:$0xf] %v925
        %990 = vst [vmem:[%s211 + $0x38] sm:$0xf] %v926
        %991 = vst [vmem:[%s211 + $0x3c] sm:$0xf] %v927
        %992 = vst [vmem:[%s211 + $0x40] sm:$0xf] %v928
        %993 = vst [vmem:[%s211 + $0x44] sm:$0xf] %v929
        %994 = vst [vmem:[%s211 + $0x48] sm:$0xf] %v930
        %995 = vst [vmem:[%s211 + $0x4c] sm:$0xf] %v931
        %996 = vst [vmem:[%s211 + $0x50] sm:$0xf] %v932
        %997 = vst [vmem:[%s211 + $0x54] sm:$0xf] %v933
        %998 = vst [vmem:[%s211 + $0x58] sm:$0xf] %v934
        %999 = vst [vmem:[%s211 + $0x5c] sm:$0xf] %v935
        %1000 = vst [vmem:[%s211 + $0x60] sm:$0xf] %v936
        %1001 = vst [vmem:[%s211 + $0x64] sm:$0xf] %v937
        %1002 = vst [vmem:[%s211 + $0x68] sm:$0xf] %v938
        %1003 = vst [vmem:[%s211 + $0x6c] sm:$0xf] %v939
        %1004 = vst [vmem:[%s211 + $0x70] sm:$0xf] %v940
        %1005 = vst [vmem:[%s211 + $0x74] sm:$0xf] %v941
        %1006 = vst [vmem:[%s211 + $0x78] sm:$0xf] %v942
        %1007 = vst [vmem:[%s211 + $0x7c] sm:$0xf] %v943
        %1008 = vst [vmem:[%s211 + $0x80] sm:$0xf] %v944
        %1009 = vst [vmem:[%s211 + $0x84] sm:$0xf] %v945
        %1010 = vst [vmem:[%s211 + $0x88] sm:$0xf] %v946
        %1011 = vst [vmem:[%s211 + $0x8c] sm:$0xf] %v947
        %1012 = vst [vmem:[%s211 + $0x90] sm:$0xf] %v948
        %1013 = vst [vmem:[%s211 + $0x94] sm:$0xf] %v949
        %1014 = vst [vmem:[%s211 + $0x98] sm:$0xf] %v950
        %1015 = vst [vmem:[%s211 + $0x9c] sm:$0xf] %v951
        %1016 = vst [vmem:[%s211 + $0xa0] sm:$0xf] %v952
        %1017 = vst [vmem:[%s211 + $0xa4] sm:$0xf] %v953
        %1018 = vst [vmem:[%s211 + $0xa8] sm:$0xf] %v954
        %1019 = vst [vmem:[%s211 + $0xac] sm:$0xf] %v955
        %1020 = vst [vmem:[%s211 + $0xb0] sm:$0xf] %v956
        %1021 = vst [vmem:[%s211 + $0xb4] sm:$0xf] %v957
        %1022 = vst [vmem:[%s211 + $0xb8] sm:$0xf] %v958
        %1023 = vst [vmem:[%s211 + $0xbc] sm:$0xf] %v959
        %1024 = vst [vmem:[%s211 + $0xc0] sm:$0xf] %v960
        %1025 = vst [vmem:[%s211 + $0xc4] sm:$0xf] %v961
        %1026 = vst [vmem:[%s211 + $0xc8] sm:$0xf] %v962
        %1027 = vst [vmem:[%s211 + $0xcc] sm:$0xf] %v963
        %1028 = vst [vmem:[%s211 + $0xd0] sm:$0xf] %v964
        %1029 = vst [vmem:[%s211 + $0xd4] sm:$0xf] %v965
        %1030 = vst [vmem:[%s211 + $0xd8] sm:$0xf] %v966
        %1031 = vst [vmem:[%s211 + $0xdc] sm:$0xf] %v967
        %1032 = vst [vmem:[%s211 + $0xe0] sm:$0xf] %v968
        %1033 = vst [vmem:[%s211 + $0xe4] sm:$0xf] %v969
        %1034 = vst [vmem:[%s211 + $0xe8] sm:$0xf] %v970
        %1035 = vst [vmem:[%s211 + $0xec] sm:$0xf] %v971
        %1036 = vst [vmem:[%s211 + $0xf0] sm:$0xf] %v972
        %1037 = vst [vmem:[%s211 + $0xf4] sm:$0xf] %v973
        %1038 = vst [vmem:[%s211 + $0xf8] sm:$0xf] %v974
        %1039 = vst [vmem:[%s211 + $0xfc] sm:$0xf] %v975
        %v1040 = vpack.c.bf16 %v753, %v753
        %v1041 = vpack.c.bf16 %v755, %v755
        %v1042 = vpack.c.bf16 %v758, %v758
        %v1043 = vpack.c.bf16 %v760, %v760
        %v1044 = vpack.c.bf16 %v763, %v763
        %v1045 = vpack.c.bf16 %v765, %v765
        %v1046 = vpack.c.bf16 %v768, %v768
        %v1047 = vpack.c.bf16 %v770, %v770
        %v1048 = vpack.c.bf16 %v773, %v773
        %v1049 = vpack.c.bf16 %v775, %v775
        %v1050 = vpack.c.bf16 %v778, %v778
        %v1051 = vpack.c.bf16 %v780, %v780
        %v1052 = vpack.c.bf16 %v783, %v783
        %v1053 = vpack.c.bf16 %v785, %v785
        %v1054 = vpack.c.bf16 %v788, %v788
        %v1055 = vpack.c.bf16 %v790, %v790
        %v1056 = vpack.c.bf16 %v793, %v793
        %v1057 = vpack.c.bf16 %v795, %v795
        %v1058 = vpack.c.bf16 %v798, %v798
        %v1059 = vpack.c.bf16 %v800, %v800
        %v1060 = vpack.c.bf16 %v803, %v803
        %v1061 = vpack.c.bf16 %v805, %v805
        %v1062 = vpack.c.bf16 %v808, %v808
        %v1063 = vpack.c.bf16 %v810, %v810
        %v1064 = vpack.c.bf16 %v813, %v813
        %v1065 = vpack.c.bf16 %v815, %v815
        %v1066 = vpack.c.bf16 %v818, %v818
        %v1067 = vpack.c.bf16 %v820, %v820
        %v1068 = vpack.c.bf16 %v823, %v823
        %v1069 = vpack.c.bf16 %v825, %v825
        %v1070 = vpack.c.bf16 %v828, %v828
        %v1071 = vpack.c.bf16 %v830, %v830
        %v1072 = vpack.c.bf16 %v833, %v833
        %v1073 = vpack.c.bf16 %v835, %v835
        %v1074 = vpack.c.bf16 %v838, %v838
        %v1075 = vpack.c.bf16 %v840, %v840
        %v1076 = vpack.c.bf16 %v843, %v843
        %v1077 = vpack.c.bf16 %v845, %v845
        %v1078 = vpack.c.bf16 %v848, %v848
        %v1079 = vpack.c.bf16 %v850, %v850
        %v1080 = vpack.c.bf16 %v853, %v853
        %v1081 = vpack.c.bf16 %v855, %v855
        %v1082 = vpack.c.bf16 %v858, %v858
        %v1083 = vpack.c.bf16 %v860, %v860
        %v1084 = vpack.c.bf16 %v863, %v863
        %v1085 = vpack.c.bf16 %v865, %v865
        %v1086 = vpack.c.bf16 %v868, %v868
        %v1087 = vpack.c.bf16 %v870, %v870
        %v1088 = vpack.c.bf16 %v873, %v873
        %v1089 = vpack.c.bf16 %v875, %v875
        %v1090 = vpack.c.bf16 %v878, %v878
        %v1091 = vpack.c.bf16 %v880, %v880
        %v1092 = vpack.c.bf16 %v883, %v883
        %v1093 = vpack.c.bf16 %v885, %v885
        %v1094 = vpack.c.bf16 %v888, %v888
        %v1095 = vpack.c.bf16 %v890, %v890
        %v1096 = vpack.c.bf16 %v893, %v893
        %v1097 = vpack.c.bf16 %v895, %v895
        %v1098 = vpack.c.bf16 %v898, %v898
        %v1099 = vpack.c.bf16 %v900, %v900
        %v1100 = vpack.c.bf16 %v903, %v903
        %v1101 = vpack.c.bf16 %v905, %v905
        %v1102 = vpack.c.bf16 %v908, %v908
        %v1103 = vpack.c.bf16 %v910, %v910
        %1104 = vst [vmem:[%s218] sm:$0xf] %v1040
        %1105 = vst [vmem:[%s218 + $0x4] sm:$0xf] %v1041
        %1106 = vst [vmem:[%s218 + $0x8] sm:$0xf] %v1042
        %1107 = vst [vmem:[%s218 + $0xc] sm:$0xf] %v1043
        %1108 = vst [vmem:[%s218 + $0x10] sm:$0xf] %v1044
        %1109 = vst [vmem:[%s218 + $0x14] sm:$0xf] %v1045
        %1110 = vst [vmem:[%s218 + $0x18] sm:$0xf] %v1046
        %1111 = vst [vmem:[%s218 + $0x1c] sm:$0xf] %v1047
        %1112 = vst [vmem:[%s218 + $0x20] sm:$0xf] %v1048
        %1113 = vst [vmem:[%s218 + $0x24] sm:$0xf] %v1049
        %1114 = vst [vmem:[%s218 + $0x28] sm:$0xf] %v1050
        %1115 = vst [vmem:[%s218 + $0x2c] sm:$0xf] %v1051
        %1116 = vst [vmem:[%s218 + $0x30] sm:$0xf] %v1052
        %1117 = vst [vmem:[%s218 + $0x34] sm:$0xf] %v1053
        %1118 = vst [vmem:[%s218 + $0x38] sm:$0xf] %v1054
        %1119 = vst [vmem:[%s218 + $0x3c] sm:$0xf] %v1055
        %1120 = vst [vmem:[%s218 + $0x40] sm:$0xf] %v1056
        %1121 = vst [vmem:[%s218 + $0x44] sm:$0xf] %v1057
        %1122 = vst [vmem:[%s218 + $0x48] sm:$0xf] %v1058
        %1123 = vst [vmem:[%s218 + $0x4c] sm:$0xf] %v1059
        %1124 = vst [vmem:[%s218 + $0x50] sm:$0xf] %v1060
        %1125 = vst [vmem:[%s218 + $0x54] sm:$0xf] %v1061
        %1126 = vst [vmem:[%s218 + $0x58] sm:$0xf] %v1062
        %1127 = vst [vmem:[%s218 + $0x5c] sm:$0xf] %v1063
        %1128 = vst [vmem:[%s218 + $0x60] sm:$0xf] %v1064
        %1129 = vst [vmem:[%s218 + $0x64] sm:$0xf] %v1065
        %1130 = vst [vmem:[%s218 + $0x68] sm:$0xf] %v1066
        %1131 = vst [vmem:[%s218 + $0x6c] sm:$0xf] %v1067
        %1132 = vst [vmem:[%s218 + $0x70] sm:$0xf] %v1068
        %1133 = vst [vmem:[%s218 + $0x74] sm:$0xf] %v1069
        %1134 = vst [vmem:[%s218 + $0x78] sm:$0xf] %v1070
        %1135 = vst [vmem:[%s218 + $0x7c] sm:$0xf] %v1071
        %1136 = vst [vmem:[%s218 + $0x80] sm:$0xf] %v1072
        %1137 = vst [vmem:[%s218 + $0x84] sm:$0xf] %v1073
        %1138 = vst [vmem:[%s218 + $0x88] sm:$0xf] %v1074
        %1139 = vst [vmem:[%s218 + $0x8c] sm:$0xf] %v1075
        %1140 = vst [vmem:[%s218 + $0x90] sm:$0xf] %v1076
        %1141 = vst [vmem:[%s218 + $0x94] sm:$0xf] %v1077
        %1142 = vst [vmem:[%s218 + $0x98] sm:$0xf] %v1078
        %1143 = vst [vmem:[%s218 + $0x9c] sm:$0xf] %v1079
        %1144 = vst [vmem:[%s218 + $0xa0] sm:$0xf] %v1080
        %1145 = vst [vmem:[%s218 + $0xa4] sm:$0xf] %v1081
        %1146 = vst [vmem:[%s218 + $0xa8] sm:$0xf] %v1082
        %1147 = vst [vmem:[%s218 + $0xac] sm:$0xf] %v1083
        %1148 = vst [vmem:[%s218 + $0xb0] sm:$0xf] %v1084
        %1149 = vst [vmem:[%s218 + $0xb4] sm:$0xf] %v1085
        %1150 = vst [vmem:[%s218 + $0xb8] sm:$0xf] %v1086
        %1151 = vst [vmem:[%s218 + $0xbc] sm:$0xf] %v1087
        %1152 = vst [vmem:[%s218 + $0xc0] sm:$0xf] %v1088
        %1153 = vst [vmem:[%s218 + $0xc4] sm:$0xf] %v1089
        %1154 = vst [vmem:[%s218 + $0xc8] sm:$0xf] %v1090
        %1155 = vst [vmem:[%s218 + $0xcc] sm:$0xf] %v1091
        %1156 = vst [vmem:[%s218 + $0xd0] sm:$0xf] %v1092
        %1157 = vst [vmem:[%s218 + $0xd4] sm:$0xf] %v1093
        %1158 = vst [vmem:[%s218 + $0xd8] sm:$0xf] %v1094
        %1159 = vst [vmem:[%s218 + $0xdc] sm:$0xf] %v1095
        %1160 = vst [vmem:[%s218 + $0xe0] sm:$0xf] %v1096
        %1161 = vst [vmem:[%s218 + $0xe4] sm:$0xf] %v1097
        %1162 = vst [vmem:[%s218 + $0xe8] sm:$0xf] %v1098
        %1163 = vst [vmem:[%s218 + $0xec] sm:$0xf] %v1099
        %1164 = vst [vmem:[%s218 + $0xf0] sm:$0xf] %v1100
        %1165 = vst [vmem:[%s218 + $0xf4] sm:$0xf] %v1101
        %1166 = vst [vmem:[%s218 + $0xf8] sm:$0xf] %v1102
        %1167 = vst [vmem:[%s218 + $0xfc] sm:$0xf] %v1103
        %s1168 = sand.u32 %s80, 1
        %s1169 = scalar_lea.sflag [#allocation4], %s1168
        %s1170 = sand.u32 %s80, 1
        %s1171 = smul.addr %s1170, 256
        %s1172 = scalar_lea.vmem [#allocation7], %s1171
        %s1173 = sand.u32 %s106, 1
        %s1174 = scalar_lea.sflag [#allocation9], %s1173
        %s1175 = sand.u32 %s106, 1
        %s1176 = smul.addr %s1175, 256
        %s1177 = scalar_lea.vmem [#allocation8], %s1176
        // Predicated region
        $region37: #{tpu_custom_call.1} parent=27 // pred_check
          %p1178 = pneg %p90
        $region38: #{tpu_custom_call.1} parent=27 // pred_check_branch
          %1180 = sbr.rel (%p1178) target = $region40
        $region39: #{tpu_custom_call.1} parent=27 // pred_region
          %s1181 = smul.u32 64, %s25
          %1183 = vsyncadd %s1169, 0
          %s1184 = smul.addr %s1181, 4
          %s1185 = scalar_lea.hbm %s2, %s1184
          %s1186 = sshll.u32 %s1172, 4
          %s1187 = int_to_ptr.vmem [resolvable:$true] %s1186
          %s1188 = sshll.u32 %s1185, 4
          %s1189 = int_to_ptr.hbm [resolvable:$true] %s1188
          %1194 = dma.vmem_to_hbm [thread:$0]  %s1187, 4096, %s1189, %s1169, 64, 64, 4
        $region40: #{tpu_custom_call.1} parent=27 // pred_fallthru
          _
        // Predicated region
        $region41: #{tpu_custom_call.1} parent=27 // pred_check
          %p1195 = pneg %p116
        $region42: #{tpu_custom_call.1} parent=27 // pred_check_branch
          %1197 = sbr.rel (%p1195) target = $region44
        $region43: #{tpu_custom_call.1} parent=27 // pred_region
          %s1198 = smul.u32 64, %s25
          %1200 = vsyncadd %s1174, 0
          %s1201 = smul.addr %s1198, 4
          %s1202 = scalar_lea.hbm %s3, %s1201
          %s1203 = sshll.u32 %s1177, 4
          %s1204 = int_to_ptr.vmem [resolvable:$true] %s1203
          %s1205 = sshll.u32 %s1202, 4
          %s1206 = int_to_ptr.hbm [resolvable:$true] %s1205
          %1211 = dma.vmem_to_hbm [thread:$0]  %s1204, 4096, %s1206, %s1174, 64, 64, 4
        $region44: #{tpu_custom_call.1} parent=27 // pred_fallthru
          _
      $region28: #{tpu_custom_call.1} parent=5 // pred_fallthru
        _
      %p1212 = scmp.le.s32.totalorder 2, %s20
      // Predicated region
      $region45: #{tpu_custom_call.1} parent=5 // pred_check
        %p1213 = pneg %p1212
      $region46: #{tpu_custom_call.1} parent=5 // pred_check_branch
        %1215 = sbr.rel (%p1213) target = $region48
      $region47: #{tpu_custom_call.1} parent=5 // pred_region
        %s1216 = ssub.s32 %s20, 2
        // Predicated region
        $region49: #{tpu_custom_call.1} parent=47 // pred_check
          %p1217 = pneg %p96
        $region50: #{tpu_custom_call.1} parent=47 // pred_check_branch
          %1219 = sbr.rel (%p1217) target = $region52
        $region51: #{tpu_custom_call.1} parent=47 // pred_region
          %s1220 = sand.u32 %s81, 1
          %s1221 = scalar_lea.sflag [#allocation4], %s1220
          %s1222 = sand.u32 %s81, 1
          %s1223 = smul.addr %s1222, 256
          %s1224 = scalar_lea.vmem [#allocation7], %s1223
          %1226 = dma.done %s1221, 4096
        $region52: #{tpu_custom_call.1} parent=47 // pred_fallthru
          _
        // Predicated region
        $region53: #{tpu_custom_call.1} parent=47 // pred_check
          %p1227 = pneg %p122
        $region54: #{tpu_custom_call.1} parent=47 // pred_check_branch
          %1229 = sbr.rel (%p1227) target = $region56
        $region55: #{tpu_custom_call.1} parent=47 // pred_region
          %s1230 = sand.u32 %s107, 1
          %s1231 = scalar_lea.sflag [#allocation9], %s1230
          %s1232 = sand.u32 %s107, 1
          %s1233 = smul.addr %s1232, 256
          %s1234 = scalar_lea.vmem [#allocation8], %s1233
          %1236 = dma.done %s1231, 4096
        $region56: #{tpu_custom_call.1} parent=47 // pred_fallthru
          _
      $region48: #{tpu_custom_call.1} parent=5 // pred_fallthru
        _
    $region6: #{tpu_custom_call.1} parent=1 // loop_footer
      %s24 = sadd.s32 1, %s20
    $region7: #{tpu_custom_call.1} parent=1 // loop_footer_branch
      %19 = sbr.rel target = $region3
    $region8: #{tpu_custom_call.1} parent=1 // loop_exit
      _
    %1237 = vsyncpa [#allocation3], 1
    %s1238 = scalar_lea.sflag [#allocation3], 1
    %1239 = vsyncpa %s1238, 1
    %1240 = vsyncpa [#allocation6], 1
    %1241 = vsyncpa [#allocation4], 1
    %s1242 = scalar_lea.sflag [#allocation4], 1
    %1243 = vsyncpa %s1242, 1
    %1244 = vsyncpa [#allocation9], 1
    %s1245 = scalar_lea.sflag [#allocation9], 1
    %1246 = vsyncpa %s1245, 1

</llo_original>
